<compile_context>
chip_gen: v6e
topology: v6e:2x2x1
jax: 0.10.0
libtpu: 0.0.40
codegen_flags: <defaults>
</compile_context>

<pallas_src>
import functools

import jax
import jax.numpy as jnp
from jax.experimental import pallas as pl
from jax.experimental.pallas import tpu as pltpu


def _cdiv(a, b):
    return (a + b - 1) // b


def _round_up(x, m):
    return _cdiv(x, m) * m


def _vmem_budget_bytes():
    """VMEM budget for this kernel's working set (per TensorCore)."""
    try:
        cap = int(pltpu.get_tpu_info().vmem_capacity_bytes)
    except Exception:
        cap = 64 * 1024 * 1024  # conservative (v7x-sized) fallback
    # Use at most half the physical VMEM, capped at 64 MiB (v6e/v5e), floored
    # at 16 MiB.  On v7x (64 MiB) this naturally halves the tile budget.
    return max(16 * 1024 * 1024, min(cap // 2, 64 * 1024 * 1024))


def _pick_row_tile(R, K, Np, io_bytes, budget_bytes):
    """Pick the largest row tile whose pipelined working set fits the budget.

    Working set / row: double-buffered input (K) + output (Np) tiles plus the
    f32 temporaries of the LayerNorm epilogue.  Fixed: double-buffered bf16
    weight (K, Np) + f32 bias.  Tile is a multiple of 256 (fills the 256-wide
    MXU; also a multiple of 128/16 for v5e MXU and bf16 sublane packing) and
    we keep >=4 grid steps when there is enough work so both v7x TensorCores
    are busy under dimension_semantics=("parallel",).
    """
    fixed = 2 * K * Np * 2 + 2 * Np * 4
    per_row = 2 * (K + Np) * io_bytes + 3 * K * 4 + 2 * Np * 4
    avail = max((budget_bytes * 3) // 4 - fixed, per_row)
    tr = int(avail // per_row)
    tr = max(16, min(tr, 2048))
    if tr >= 256 and R > 256:
        tr = (tr // 256) * 256
        while tr > 256 and _cdiv(R, tr) < 4:  # keep a few steps for 2-TC chips
            tr -= 256
        # same number of grid steps with the least row padding
        steps = _cdiv(R, tr)
        tr = min(tr, _round_up(_cdiv(R, steps), 256))
    else:
        tr = _round_up(min(tr, R), 16)
    return max(16, min(tr, _round_up(R, 16)))


def _merge_norm_reduce_kernel(x_ref, w_ref, b_ref, o_ref, *, eps, mxu_dtype):
    # x_ref: (TR, 4C)  merged-patch features
    # w_ref: (4C, Np)  reduction weight with LayerNorm gamma folded in
    # b_ref: (1, Np)   beta @ W^T (f32), zero-padded to Np lanes
    # o_ref: (TR, Np)
    x = x_ref[...].astype(jnp.float32)
    mean = jnp.mean(x, axis=-1, keepdims=True)
    cen = x - mean
    var = jnp.mean(cen * cen, axis=-1, keepdims=True)
    xhat = cen * jax.lax.rsqrt(var + eps)          # gamma/beta folded into w/b
    y = jnp.dot(xhat.astype(mxu_dtype), w_ref[...],
                preferred_element_type=jnp.float32)
    o_ref[...] = (y + b_ref[...]).astype(o_ref.dtype)


def patch_merging_forward(x, H, W, weight, gamma, beta, *,
                          eps=1e-5, mxu_dtype=jnp.bfloat16, row_tile=None):
    """x: (B, H*W, C). weight: (2C, 4C) torch nn.Linear layout. gamma/beta:
    (4C,) LayerNorm affine.  Returns (B, ceil(H/2)*ceil(W/2), 2C)."""
    B, L, C = x.shape
    assert L == H * W, "input feature has wrong size"

    xv = x.reshape(B, H, W, C)
    # pad odd H/W on the bottom/right (matches F.pad(x, (0,0,0,W%2,0,H%2)))
    if (H % 2 == 1) or (W % 2 == 1):
        xv = jnp.pad(xv, ((0, 0), (0, H % 2), (0, W % 2), (0, 0)))
    Hp, Wp = xv.shape[1], xv.shape[2]

    # 2x2 spatial gather + channel concat (XLA fuses this chain into one copy).
    # TODO(synk): fuse this gather into the pallas_call (BlockSpec over the
    # (B,Hp,Wp,C) view + in-kernel deinterleave) to cut the extra HBM round trip.
    x0 = xv[:, 0::2, 0::2, :]
    x1 = xv[:, 1::2, 0::2, :]
    x2 = xv[:, 0::2, 1::2, :]
    x3 = xv[:, 1::2, 1::2, :]
    xm = jnp.concatenate([x0, x1, x2, x3], axis=-1)       # (B, Hp/2, Wp/2, 4C)
    L2 = (Hp // 2) * (Wp // 2)
    K = 4 * C
    N = 2 * C
    Np = _round_up(N, 128)                                 # lane-dense output
    xm = xm.reshape(B * L2, K)
    R = B * L2

    # Fold the LayerNorm affine into the reduction weight / bias, cast the
    # weight once for the MXU (bf16 on all current TPUs).
    w_f32 = weight.astype(jnp.float32)                     # (2C, 4C)
    w_fold = gamma.astype(jnp.float32)[:, None] * w_f32.T  # (4C, 2C)
    b_fold = beta.astype(jnp.float32)[None, :] @ w_f32.T   # (1, 2C)
    if Np != N:
        w_fold = jnp.pad(w_fold, ((0, 0), (0, Np - N)))
        b_fold = jnp.pad(b_fold, ((0, 0), (0, Np - N)))
    w_fold = w_fold.astype(mxu_dtype)

    budget = _vmem_budget_bytes()
    io_bytes = jnp.dtype(x.dtype).itemsize
    if row_tile is None:
        tr = _pick_row_tile(R, K, Np, io_bytes, budget)
    else:
        tr = max(16, min(_round_up(int(row_tile), 16), _round_up(R, 16)))
    Rp = _round_up(R, tr)
    if Rp != R:
        # zero rows produce finite values (cen == 0) and are sliced off below
        xm = jnp.pad(xm, ((0, Rp - R), (0, 0)))

    kernel = functools.partial(_merge_norm_reduce_kernel,
                               eps=eps, mxu_dtype=mxu_dtype)
    out = pl.pallas_call(
        kernel,
        out_shape=jax.ShapeDtypeStruct((Rp, Np), x.dtype),
        grid_spec=pltpu.PrefetchScalarGridSpec(
            num_scalar_prefetch=0,
            grid=(Rp // tr,),
            in_specs=[
                pl.BlockSpec((tr, K), lambda i: (i, 0)),     # row tile
                pl.BlockSpec((K, Np), lambda i: (0, 0)),     # resident weight
                pl.BlockSpec((1, Np), lambda i: (0, 0)),     # resident bias
            ],
            out_specs=pl.BlockSpec((tr, Np), lambda i: (i, 0)),
        ),
        compiler_params=pltpu.CompilerParams(
            dimension_semantics=("parallel",),
            vmem_limit_bytes=int(budget)),
    )(xm, w_fold, b_fold)

    return out[:R, :N].reshape(B, L2, N)


def _reference(x, H, W, weight, gamma, beta):
    B, L, C = x.shape
    xv = x.reshape(B, H, W, C)
    if (H % 2 == 1) or (W % 2 == 1):
        xv = jnp.pad(xv, ((0, 0), (0, H % 2), (0, W % 2), (0, 0)))
    x0 = xv[:, 0::2, 0::2, :]
    x1 = xv[:, 1::2, 0::2, :]
    x2 = xv[:, 0::2, 1::2, :]
    x3 = xv[:, 1::2, 1::2, :]
    xm = jnp.concatenate([x0, x1, x2, x3], -1).reshape(B, -1, 4 * C)
    mean = jnp.mean(xm, -1, keepdims=True)
    var = jnp.mean((xm - mean) ** 2, -1, keepdims=True)
    xn = (xm - mean) / jnp.sqrt(var + 1e-5) * gamma + beta
    return xn @ weight.T


if __name__ == "__main__":
    # small shapes consistent with the module: dim=C=4, B=2, H=W=16
    B, C, H, W = 2, 4, 16, 16
    key = jax.random.PRNGKey(0)
    kx, kw, kg, kb = jax.random.split(key, 4)

    x = jax.random.normal(kx, (B, H * W, C), dtype=jnp.float32)
    # synthetic params: nn.Linear(4C, 2C, bias=False) weight + LayerNorm(4C)
    weight = jax.random.normal(kw, (2 * C, 4 * C), dtype=jnp.float32) * 0.1
    gamma = 1.0 + 0.05 * jax.random.normal(kg, (4 * C,), dtype=jnp.float32)
    beta = 0.05 * jax.random.normal(kb, (4 * C,), dtype=jnp.float32)

    ref = _reference(x, H, W, weight, gamma, beta)

    # default (fast) path: bf16 MXU operands -> compare at bf16-level tolerance
    fwd = jax.jit(patch_merging_forward, static_argnums=(1, 2))
    out = jax.block_until_ready(fwd(x, H, W, weight, gamma, beta))
    assert out.shape == (B, (H // 2) * (W // 2), 2 * C), out.shape
    assert jnp.allclose(out, ref, atol=2e-2, rtol=2e-2), "bf16 path mismatch"

    # f32 MXU path: validates the fused math (folded affine, padding) tightly
    out_f32 = jax.block_until_ready(
        patch_merging_forward(x, H, W, weight, gamma, beta,
                              mxu_dtype=jnp.float32))
    assert jnp.allclose(out_f32, ref, atol=1e-4, rtol=1e-4), "f32 path mismatch"

    print("KERNEL_OK")
</pallas_src>

<mosaic_0001>
module attributes {stable_mosaic.version = 11 : i64} {
  func.func @_merge_norm_reduce_kernel(%arg0: i32, %arg1: memref<128x16xf32, #tpu.memory_space<vmem>>, %arg2: memref<16x128xbf16, #tpu.memory_space<vmem>>, %arg3: memref<1x128xf32, #tpu.memory_space<vmem>>, %arg4: memref<128x128xf32, #tpu.memory_space<vmem>>) attributes {dimension_semantics = [#tpu.dimension_semantics<parallel>], iteration_bounds = array<i64: 1>, scalar_prefetch = 0 : i64, scratch_operands = 0 : i64, tpu.core_type = #tpu.core_type<tc>, window_params = [{transform_indices = @transform_0, window_bounds = array<i64: 128, 16>}, {pipeline_mode = #tpu.pipeline_mode<synchronous>, transform_indices = @transform_1, window_bounds = array<i64: 16, 128>}, {pipeline_mode = #tpu.pipeline_mode<synchronous>, transform_indices = @transform_2, window_bounds = array<i64: 1, 128>}, {transform_indices = @transform_3, window_bounds = array<i64: 128, 128>}]} {
    %c0 = arith.constant 0 : index
    %c0_0 = arith.constant 0 : index
    %0 = vector.load %arg1[%c0, %c0_0] : memref<128x16xf32, #tpu.memory_space<vmem>>, vector<128x16xf32>
    %cst = arith.constant dense<0.000000e+00> : vector<128xf32>
    %1 = vector.multi_reduction <add>, %0, %cst [1] : vector<128x16xf32> to vector<128xf32>
    %2 = vector.shape_cast %1 : vector<128xf32> to vector<128x1xf32>
    %cst_1 = arith.constant 1.600000e+01 : f32
    %3 = vector.broadcast %cst_1 : f32 to vector<128x1xf32>
    %4 = arith.divf %2, %3 : vector<128x1xf32>
    %5 = vector.broadcast %4 : vector<128x1xf32> to vector<128x16xf32>
    %6 = arith.subf %0, %5 : vector<128x16xf32>
    %7 = arith.mulf %6, %6 : vector<128x16xf32>
    %cst_2 = arith.constant dense<0.000000e+00> : vector<128xf32>
    %8 = vector.multi_reduction <add>, %7, %cst_2 [1] : vector<128x16xf32> to vector<128xf32>
    %9 = vector.shape_cast %8 : vector<128xf32> to vector<128x1xf32>
    %cst_3 = arith.constant 1.600000e+01 : f32
    %10 = vector.broadcast %cst_3 : f32 to vector<128x1xf32>
    %11 = arith.divf %9, %10 : vector<128x1xf32>
    %cst_4 = arith.constant 9.99999974E-6 : f32
    %12 = vector.broadcast %cst_4 : f32 to vector<128x1xf32>
    %13 = arith.addf %11, %12 : vector<128x1xf32>
    %14 = math.rsqrt %13 : vector<128x1xf32>
    %15 = vector.broadcast %14 : vector<128x1xf32> to vector<128x16xf32>
    %16 = arith.mulf %6, %15 : vector<128x16xf32>
    %17 = arith.truncf %16 : vector<128x16xf32> to vector<128x16xbf16>
    %c0_5 = arith.constant 0 : index
    %c0_6 = arith.constant 0 : index
    %18 = vector.load %arg2[%c0_5, %c0_6] : memref<16x128xbf16, #tpu.memory_space<vmem>>, vector<16x128xbf16>
    %cst_7 = arith.constant dense<0.000000e+00> : vector<128x128xf32>
    %19 = tpu.matmul %17, %18, %cst_7 {dimension_numbers = #tpu.dot_dimension_numbers<[1], [0], [0], [1], [0, 0, 1, 1], [], []>} : vector<128x16xbf16>, vector<16x128xbf16>, vector<128x128xf32> -> vector<128x128xf32>
    %c0_8 = arith.constant 0 : index
    %c0_9 = arith.constant 0 : index
    %20 = vector.load %arg3[%c0_8, %c0_9] : memref<1x128xf32, #tpu.memory_space<vmem>>, vector<1x128xf32>
    %21 = vector.broadcast %20 : vector<1x128xf32> to vector<128x128xf32>
    %22 = arith.addf %19, %21 : vector<128x128xf32>
    %c0_10 = arith.constant 0 : index
    %c0_11 = arith.constant 0 : index
    %23 = vector.load %arg4[%c0_10, %c0_11] : memref<128x128xf32, #tpu.memory_space<vmem>>, vector<128x128xf32>
    tpu.vector_store %arg4[%c0_10, %c0_11], %22 {strides = array<i32>} : memref<128x128xf32, #tpu.memory_space<vmem>>, vector<128x128xf32>,
    return
  }
  func.func @transform_0(%arg0: i32) -> (i32, i32) {
    %c0_i32 = arith.constant 0 : i32
    %c0_i32_0 = arith.constant 0 : i32
    return %arg0, %c0_i32 : i32, i32
  }
  func.func @transform_1(%arg0: i32) -> (i32, i32) {
    %c0_i32 = arith.constant 0 : i32
    %c0_i32_0 = arith.constant 0 : i32
    %c0_i32_1 = arith.constant 0 : i32
    return %c0_i32, %c0_i32_0 : i32, i32
  }
  func.func @transform_2(%arg0: i32) -> (i32, i32) {
    %c0_i32 = arith.constant 0 : i32
    %c0_i32_0 = arith.constant 0 : i32
    %c0_i32_1 = arith.constant 0 : i32
    return %c0_i32, %c0_i32_0 : i32, i32
  }
  func.func @transform_3(%arg0: i32) -> (i32, i32) {
    %c0_i32 = arith.constant 0 : i32
    %c0_i32_0 = arith.constant 0 : i32
    return %arg0, %c0_i32 : i32, i32
  }
}

</mosaic_0001>

<llo_original>
// kernel: patch_merging_forward.1
$region0: #{patch_merging_forward.1}
  #allocation0 [shape = 'u32[]', space=smem, size = 0x4, offset = 0x4, fixed_abs, tag = 'smem constant byte address 0x4 - core index']
  #allocation1 [shape = 'u32[144,128]{1,0:T(1,128)}', space=vmem, size = 0x12000, scoped, tag = 'internal scratch']
  %s0 = inlined_call_operand.vmem [shape: f32[128,16], index: 0, kind: input, shape index: {}]
  %s1 = inlined_call_operand.vmem [shape: bf16[16,128], index: 1, kind: input, shape index: {}]
  %s2 = inlined_call_operand.vmem [shape: f32[1,128], index: 2, kind: input, shape index: {}]
  %s3 = inlined_call_operand.vmem [shape: f32[128,128], index: 3, kind: output, shape index: {}]
  %s4 = sld [smem:[#allocation0]]
  $region22: #{patch_merging_forward.1} parent=0
    _
  %s6 = ssub.s32 1, %s4
  %s7 = scalar_select 0, %s6, %s4
  // Predicated region
  $region2: #{patch_merging_forward.1} parent=0 // pred_check
    _
  $region3: #{patch_merging_forward.1} parent=0 // pred_check_branch
    %9 = sbr.rel (0) target = $region5
  $region4: #{patch_merging_forward.1} parent=0 // pred_region
    _
  $region5: #{patch_merging_forward.1} parent=0 // pred_fallthru
    _
  // Predicated region
  $region6: #{patch_merging_forward.1} parent=0 // pred_check
    _
  $region7: #{patch_merging_forward.1} parent=0 // pred_check_branch
    %11 = sbr.rel (0) target = $region9
  $region8: #{patch_merging_forward.1} parent=0 // pred_region
    _
  $region9: #{patch_merging_forward.1} parent=0 // pred_fallthru
    _
  // Predicated region
  $region10: #{patch_merging_forward.1} parent=0 // pred_check
    _
  $region11: #{patch_merging_forward.1} parent=0 // pred_check_branch
    %13 = sbr.rel (0) target = $region13
  $region12: #{patch_merging_forward.1} parent=0 // pred_region
    _
  $region13: #{patch_merging_forward.1} parent=0 // pred_fallthru
    _
  %v15 = vld [vmem:[%s0] sm:$0xff]
  %v16 = vld [vmem:[%s0 + $0x8] sm:$0xff]
  %v17 = vld [vmem:[%s0 + $0x10] sm:$0xff]
  %v18 = vld [vmem:[%s0 + $0x18] sm:$0xff]
  %v19 = vld [vmem:[%s0 + $0x20] sm:$0xff]
  %v20 = vld [vmem:[%s0 + $0x28] sm:$0xff]
  %v21 = vld [vmem:[%s0 + $0x30] sm:$0xff]
  %v22 = vld [vmem:[%s0 + $0x38] sm:$0xff]
  %v23 = vld [vmem:[%s0 + $0x40] sm:$0xff]
  %v24 = vld [vmem:[%s0 + $0x48] sm:$0xff]
  %v25 = vld [vmem:[%s0 + $0x50] sm:$0xff]
  %v26 = vld [vmem:[%s0 + $0x58] sm:$0xff]
  %v27 = vld [vmem:[%s0 + $0x60] sm:$0xff]
  %v28 = vld [vmem:[%s0 + $0x68] sm:$0xff]
  %v29 = vld [vmem:[%s0 + $0x70] sm:$0xff]
  %v30 = vld [vmem:[%s0 + $0x78] sm:$0xff]
  %vm31 = vcmask 130048
  %v32 = vsel %vm31, %v15, 0.0
  %33 = vadd.xlane.f32.xlu0 %v32
  %v34 = vpop.xlane.xlu0 %33
  %v35 = vsel %vm31, %v16, 0.0
  %36 = vadd.xlane.f32.xlu0 %v35
  %v37 = vpop.xlane.xlu0 %36
  %v38 = vsel %vm31, %v17, 0.0
  %39 = vadd.xlane.f32.xlu0 %v38
  %v40 = vpop.xlane.xlu0 %39
  %v41 = vsel %vm31, %v18, 0.0
  %42 = vadd.xlane.f32.xlu0 %v41
  %v43 = vpop.xlane.xlu0 %42
  %v44 = vsel %vm31, %v19, 0.0
  %45 = vadd.xlane.f32.xlu0 %v44
  %v46 = vpop.xlane.xlu0 %45
  %v47 = vsel %vm31, %v20, 0.0
  %48 = vadd.xlane.f32.xlu0 %v47
  %v49 = vpop.xlane.xlu0 %48
  %v50 = vsel %vm31, %v21, 0.0
  %51 = vadd.xlane.f32.xlu0 %v50
  %v52 = vpop.xlane.xlu0 %51
  %v53 = vsel %vm31, %v22, 0.0
  %54 = vadd.xlane.f32.xlu0 %v53
  %v55 = vpop.xlane.xlu0 %54
  %v56 = vsel %vm31, %v23, 0.0
  %57 = vadd.xlane.f32.xlu0 %v56
  %v58 = vpop.xlane.xlu0 %57
  %v59 = vsel %vm31, %v24, 0.0
  %60 = vadd.xlane.f32.xlu0 %v59
  %v61 = vpop.xlane.xlu0 %60
  %v62 = vsel %vm31, %v25, 0.0
  %63 = vadd.xlane.f32.xlu0 %v62
  %v64 = vpop.xlane.xlu0 %63
  %v65 = vsel %vm31, %v26, 0.0
  %66 = vadd.xlane.f32.xlu0 %v65
  %v67 = vpop.xlane.xlu0 %66
  %v68 = vsel %vm31, %v27, 0.0
  %69 = vadd.xlane.f32.xlu0 %v68
  %v70 = vpop.xlane.xlu0 %69
  %v71 = vsel %vm31, %v28, 0.0
  %72 = vadd.xlane.f32.xlu0 %v71
  %v73 = vpop.xlane.xlu0 %72
  %v74 = vsel %vm31, %v29, 0.0
  %75 = vadd.xlane.f32.xlu0 %v74
  %v76 = vpop.xlane.xlu0 %75
  %v77 = vsel %vm31, %v30, 0.0
  %78 = vadd.xlane.f32.xlu0 %v77
  %v79 = vpop.xlane.xlu0 %78
  %v80 = vrcp.pop 16.0
  %v81 = vmul.f32 %v34, %v80
  %v82 = vmul.f32 %v37, %v80
  %v83 = vmul.f32 %v40, %v80
  %v84 = vmul.f32 %v43, %v80
  %v85 = vmul.f32 %v46, %v80
  %v86 = vmul.f32 %v49, %v80
  %v87 = vmul.f32 %v52, %v80
  %v88 = vmul.f32 %v55, %v80
  %v89 = vmul.f32 %v58, %v80
  %v90 = vmul.f32 %v61, %v80
  %v91 = vmul.f32 %v64, %v80
  %v92 = vmul.f32 %v67, %v80
  %v93 = vmul.f32 %v70, %v80
  %v94 = vmul.f32 %v73, %v80
  %v95 = vmul.f32 %v76, %v80
  %v96 = vmul.f32 %v79, %v80
  %v97 = vsub.f32 %v15, %v81
  %v98 = vsub.f32 %v16, %v82
  %v99 = vsub.f32 %v17, %v83
  %v100 = vsub.f32 %v18, %v84
  %v101 = vsub.f32 %v19, %v85
  %v102 = vsub.f32 %v20, %v86
  %v103 = vsub.f32 %v21, %v87
  %v104 = vsub.f32 %v22, %v88
  %v105 = vsub.f32 %v23, %v89
  %v106 = vsub.f32 %v24, %v90
  %v107 = vsub.f32 %v25, %v91
  %v108 = vsub.f32 %v26, %v92
  %v109 = vsub.f32 %v27, %v93
  %v110 = vsub.f32 %v28, %v94
  %v111 = vsub.f32 %v29, %v95
  %v112 = vsub.f32 %v30, %v96
  %v113 = vmul.f32 %v97, %v97
  %v114 = vmul.f32 %v98, %v98
  %v115 = vmul.f32 %v99, %v99
  %v116 = vmul.f32 %v100, %v100
  %v117 = vmul.f32 %v101, %v101
  %v118 = vmul.f32 %v102, %v102
  %v119 = vmul.f32 %v103, %v103
  %v120 = vmul.f32 %v104, %v104
  %v121 = vmul.f32 %v105, %v105
  %v122 = vmul.f32 %v106, %v106
  %v123 = vmul.f32 %v107, %v107
  %v124 = vmul.f32 %v108, %v108
  %v125 = vmul.f32 %v109, %v109
  %v126 = vmul.f32 %v110, %v110
  %v127 = vmul.f32 %v111, %v111
  %v128 = vmul.f32 %v112, %v112
  %v129 = vsel %vm31, %v113, 0.0
  %130 = vadd.xlane.f32.xlu0 %v129
  %v131 = vpop.xlane.xlu0 %130
  %v132 = vsel %vm31, %v114, 0.0
  %133 = vadd.xlane.f32.xlu0 %v132
  %v134 = vpop.xlane.xlu0 %133
  %v135 = vsel %vm31, %v115, 0.0
  %136 = vadd.xlane.f32.xlu0 %v135
  %v137 = vpop.xlane.xlu0 %136
  %v138 = vsel %vm31, %v116, 0.0
  %139 = vadd.xlane.f32.xlu0 %v138
  %v140 = vpop.xlane.xlu0 %139
  %v141 = vsel %vm31, %v117, 0.0
  %142 = vadd.xlane.f32.xlu0 %v141
  %v143 = vpop.xlane.xlu0 %142
  %v144 = vsel %vm31, %v118, 0.0
  %145 = vadd.xlane.f32.xlu0 %v144
  %v146 = vpop.xlane.xlu0 %145
  %v147 = vsel %vm31, %v119, 0.0
  %148 = vadd.xlane.f32.xlu0 %v147
  %v149 = vpop.xlane.xlu0 %148
  %v150 = vsel %vm31, %v120, 0.0
  %151 = vadd.xlane.f32.xlu0 %v150
  %v152 = vpop.xlane.xlu0 %151
  %v153 = vsel %vm31, %v121, 0.0
  %154 = vadd.xlane.f32.xlu0 %v153
  %v155 = vpop.xlane.xlu0 %154
  %v156 = vsel %vm31, %v122, 0.0
  %157 = vadd.xlane.f32.xlu0 %v156
  %v158 = vpop.xlane.xlu0 %157
  %v159 = vsel %vm31, %v123, 0.0
  %160 = vadd.xlane.f32.xlu0 %v159
  %v161 = vpop.xlane.xlu0 %160
  %v162 = vsel %vm31, %v124, 0.0
  %163 = vadd.xlane.f32.xlu0 %v162
  %v164 = vpop.xlane.xlu0 %163
  %v165 = vsel %vm31, %v125, 0.0
  %166 = vadd.xlane.f32.xlu0 %v165
  %v167 = vpop.xlane.xlu0 %166
  %v168 = vsel %vm31, %v126, 0.0
  %169 = vadd.xlane.f32.xlu0 %v168
  %v170 = vpop.xlane.xlu0 %169
  %v171 = vsel %vm31, %v127, 0.0
  %172 = vadd.xlane.f32.xlu0 %v171
  %v173 = vpop.xlane.xlu0 %172
  %v174 = vsel %vm31, %v128, 0.0
  %175 = vadd.xlane.f32.xlu0 %v174
  %v176 = vpop.xlane.xlu0 %175
  %v177 = vmul.f32 %v131, %v80
  %v178 = vmul.f32 %v134, %v80
  %v179 = vmul.f32 %v137, %v80
  %v180 = vmul.f32 %v140, %v80
  %v181 = vmul.f32 %v143, %v80
  %v182 = vmul.f32 %v146, %v80
  %v183 = vmul.f32 %v149, %v80
  %v184 = vmul.f32 %v152, %v80
  %v185 = vmul.f32 %v155, %v80
  %v186 = vmul.f32 %v158, %v80
  %v187 = vmul.f32 %v161, %v80
  %v188 = vmul.f32 %v164, %v80
  %v189 = vmul.f32 %v167, %v80
  %v190 = vmul.f32 %v170, %v80
  %v191 = vmul.f32 %v173, %v80
  %v192 = vmul.f32 %v176, %v80
  %v193 = vadd.f32 %v177, 1e-05
  %v194 = vadd.f32 %v178, 1e-05
  %v195 = vadd.f32 %v179, 1e-05
  %v196 = vadd.f32 %v180, 1e-05
  %v197 = vadd.f32 %v181, 1e-05
  %v198 = vadd.f32 %v182, 1e-05
  %v199 = vadd.f32 %v183, 1e-05
  %v200 = vadd.f32 %v184, 1e-05
  %v201 = vadd.f32 %v185, 1e-05
  %v202 = vadd.f32 %v186, 1e-05
  %v203 = vadd.f32 %v187, 1e-05
  %v204 = vadd.f32 %v188, 1e-05
  %v205 = vadd.f32 %v189, 1e-05
  %v206 = vadd.f32 %v190, 1e-05
  %v207 = vadd.f32 %v191, 1e-05
  %v208 = vadd.f32 %v192, 1e-05
  %v209 = vrsqrt.pop %v193
  %v210 = vrsqrt.pop %v194
  %v211 = vrsqrt.pop %v195
  %v212 = vrsqrt.pop %v196
  %v213 = vrsqrt.pop %v197
  %v214 = vrsqrt.pop %v198
  %v215 = vrsqrt.pop %v199
  %v216 = vrsqrt.pop %v200
  %v217 = vrsqrt.pop %v201
  %v218 = vrsqrt.pop %v202
  %v219 = vrsqrt.pop %v203
  %v220 = vrsqrt.pop %v204
  %v221 = vrsqrt.pop %v205
  %v222 = vrsqrt.pop %v206
  %v223 = vrsqrt.pop %v207
  %v224 = vrsqrt.pop %v208
  %v225 = vmul.f32 %v97, %v209
  %v226 = vmul.f32 %v98, %v210
  %v227 = vmul.f32 %v99, %v211
  %v228 = vmul.f32 %v100, %v212
  %v229 = vmul.f32 %v101, %v213
  %v230 = vmul.f32 %v102, %v214
  %v231 = vmul.f32 %v103, %v215
  %v232 = vmul.f32 %v104, %v216
  %v233 = vmul.f32 %v105, %v217
  %v234 = vmul.f32 %v106, %v218
  %v235 = vmul.f32 %v107, %v219
  %v236 = vmul.f32 %v108, %v220
  %v237 = vmul.f32 %v109, %v221
  %v238 = vmul.f32 %v110, %v222
  %v239 = vmul.f32 %v111, %v223
  %v240 = vmul.f32 %v112, %v224
  %v241 = vpack.c.bf16 %v226, %v225
  %v242 = vpack.c.bf16 %v228, %v227
  %v243 = vpack.c.bf16 %v230, %v229
  %v244 = vpack.c.bf16 %v232, %v231
  %v245 = vpack.c.bf16 %v234, %v233
  %v246 = vpack.c.bf16 %v236, %v235
  %v247 = vpack.c.bf16 %v238, %v237
  %v248 = vpack.c.bf16 %v240, %v239
  %v249 = vld [vmem:[%s1] sm:$0xf]
  %v250 = vld [vmem:[%s1 + $0x4] sm:$0xf]
  %v251 = vld [vmem:[%s2] sm:$0x1]
  %v253 = vlaneseq
  %v254 = vshrl.u32 %v253, 7
  %v255 = vsub.s32 0, %v254
  %v256 = vrot.slane %v251, %v255
  %v260 = vunpack.c.l.b16 %v249
  %v261 = vunpack.c.l.b16 %v250
  %v262 = vpack.c.b16 %v261, %v260
  %v265 = vsel %vm31, %v241, 0
  %v268 = vsel %vm31, %v242, 0
  %v271 = vsel %vm31, %v243, 0
  %v274 = vsel %vm31, %v244, 0
  %v277 = vsel %vm31, %v245, 0
  %v280 = vsel %vm31, %v246, 0
  %v283 = vsel %vm31, %v247, 0
  %v286 = vsel %vm31, %v248, 0
  %288 = vmatprep.subr.bf16.mxu0 0
  %289 = vmatpush1.bf16.msra.mxu0 0
  %290 = vmatprep.subr.bf16.mxu0 0
  %291 = vmatpush1.bf16.msra.mxu0 0
  %292 = vmatprep.subr.bf16.mxu0 0
  %293 = vmatpush1.bf16.msra.mxu0 0
  %294 = vmatprep.subr.bf16.mxu0 0
  %295 = vmatpush1.bf16.msra.mxu0 0
  %296 = vmatprep.subr.bf16.mxu0 0
  %297 = vmatpush1.bf16.msra.mxu0 0
  %298 = vmatprep.subr.bf16.mxu0 0
  %299 = vmatpush1.bf16.msra.mxu0 0
  %300 = vmatprep.subr.bf16.mxu0 0
  %301 = vmatpush1.bf16.msra.mxu0 0
  %302 = vmatprep.subr.bf16.mxu0 0
  %303 = vmatpush1.bf16.msra.mxu0 %v262
  %304 = vmatprep.subr.bf16.mxu0 0
  %305 = vmatpush2.bf16.msra.mxu0 0
  %306 = vmatprep.subr.bf16.mxu0 0
  %307 = vmatpush2.bf16.msra.mxu0 0
  %308 = vmatprep.subr.bf16.mxu0 0
  %309 = vmatpush2.bf16.msra.mxu0 0
  %310 = vmatprep.subr.bf16.mxu0 0
  %311 = vmatpush2.bf16.msra.mxu0 0
  %312 = vmatprep.subr.bf16.mxu0 0
  %313 = vmatpush2.bf16.msra.mxu0 0
  %314 = vmatprep.subr.bf16.mxu0 0
  %315 = vmatpush2.bf16.msra.mxu0 0
  %316 = vmatprep.subr.bf16.mxu0 0
  %317 = vmatpush2.bf16.msra.mxu0 0
  %318 = vmatprep.subr.bf16.mxu0 0
  %319 = vmatpush2.bf16.msra.mxu0 0
  %320 = vmatprep.mubr.bf16.mxu0 0
  %321 = vmatmul.mubr.bf16.gmra.mxu0 %v265
  %v322 = vpop.f32.mrf.mxu0
  %v323 = vadd.f32 %v256, %v322
  %v324 = vpop.f32.mrf.mxu0
  %v325 = vpop.f32.mrf.mxu0
  %v326 = vadd.f32 %v256, %v325
  %v327 = vpop.f32.mrf.mxu0
  %328 = vmatprep.mubr.bf16.mxu0 0
  %329 = vmatmul.mubr.bf16.gmra.mxu0 %v268
  %v330 = vpop.f32.mrf.mxu0
  %v331 = vadd.f32 %v256, %v330
  %v332 = vpop.f32.mrf.mxu0
  %v333 = vpop.f32.mrf.mxu0
  %v334 = vadd.f32 %v256, %v333
  %v335 = vpop.f32.mrf.mxu0
  %336 = vmatprep.mubr.bf16.mxu0 0
  %337 = vmatmul.mubr.bf16.gmra.mxu0 %v271
  %v338 = vpop.f32.mrf.mxu0
  %v339 = vadd.f32 %v256, %v338
  %v340 = vpop.f32.mrf.mxu0
  %v341 = vpop.f32.mrf.mxu0
  %v342 = vadd.f32 %v256, %v341
  %v343 = vpop.f32.mrf.mxu0
  %344 = vmatprep.mubr.bf16.mxu0 0
  %345 = vmatmul.mubr.bf16.gmra.mxu0 %v274
  %v346 = vpop.f32.mrf.mxu0
  %v347 = vadd.f32 %v256, %v346
  %v348 = vpop.f32.mrf.mxu0
  %v349 = vpop.f32.mrf.mxu0
  %v350 = vadd.f32 %v256, %v349
  %v351 = vpop.f32.mrf.mxu0
  %352 = vmatprep.mubr.bf16.mxu0 0
  %353 = vmatmul.mubr.bf16.gmra.mxu0 %v277
  %v354 = vpop.f32.mrf.mxu0
  %v355 = vadd.f32 %v256, %v354
  %v356 = vpop.f32.mrf.mxu0
  %v357 = vpop.f32.mrf.mxu0
  %v358 = vadd.f32 %v256, %v357
  %v359 = vpop.f32.mrf.mxu0
  %360 = vmatprep.mubr.bf16.mxu0 0
  %361 = vmatmul.mubr.bf16.gmra.mxu0 %v280
  %v362 = vpop.f32.mrf.mxu0
  %v363 = vadd.f32 %v256, %v362
  %v364 = vpop.f32.mrf.mxu0
  %v365 = vpop.f32.mrf.mxu0
  %v366 = vadd.f32 %v256, %v365
  %v367 = vpop.f32.mrf.mxu0
  %368 = vmatprep.mubr.bf16.mxu0 0
  %369 = vmatmul.mubr.bf16.gmra.mxu0 %v283
  %v370 = vpop.f32.mrf.mxu0
  %v371 = vadd.f32 %v256, %v370
  %v372 = vpop.f32.mrf.mxu0
  %v373 = vpop.f32.mrf.mxu0
  %v374 = vadd.f32 %v256, %v373
  %v375 = vpop.f32.mrf.mxu0
  %376 = vmatprep.mubr.bf16.mxu0 0
  %377 = vmatmul.mubr.bf16.gmra.mxu0 %v286
  %v378 = vpop.f32.mrf.mxu0
  %v379 = vadd.f32 %v256, %v378
  %v380 = vpop.f32.mrf.mxu0
  %v381 = vpop.f32.mrf.mxu0
  %v382 = vadd.f32 %v256, %v381
  %v383 = vpop.f32.mrf.mxu0
  %384 = vdwg.mxu0
  %385 = vst [vmem:[%s3] sm:$0xff] %v323
  %386 = vst [vmem:[%s3 + $0x8] sm:$0xff] %v326
  %387 = vst [vmem:[%s3 + $0x10] sm:$0xff] %v331
  %388 = vst [vmem:[%s3 + $0x18] sm:$0xff] %v334
  %389 = vst [vmem:[%s3 + $0x20] sm:$0xff] %v339
  %390 = vst [vmem:[%s3 + $0x28] sm:$0xff] %v342
  %391 = vst [vmem:[%s3 + $0x30] sm:$0xff] %v347
  %392 = vst [vmem:[%s3 + $0x38] sm:$0xff] %v350
  %393 = vst [vmem:[%s3 + $0x40] sm:$0xff] %v355
  %394 = vst [vmem:[%s3 + $0x48] sm:$0xff] %v358
  %395 = vst [vmem:[%s3 + $0x50] sm:$0xff] %v363
  %396 = vst [vmem:[%s3 + $0x58] sm:$0xff] %v366
  %397 = vst [vmem:[%s3 + $0x60] sm:$0xff] %v371
  %398 = vst [vmem:[%s3 + $0x68] sm:$0xff] %v374
  %399 = vst [vmem:[%s3 + $0x70] sm:$0xff] %v379
  %400 = vst [vmem:[%s3 + $0x78] sm:$0xff] %v382
  // Predicated region
  $region14: #{patch_merging_forward.1} parent=0 // pred_check
    _
  $region15: #{patch_merging_forward.1} parent=0 // pred_check_branch
    %402 = sbr.rel (0) target = $region17
  $region16: #{patch_merging_forward.1} parent=0 // pred_region
    _
  $region17: #{patch_merging_forward.1} parent=0 // pred_fallthru
    _
  // Predicated region
  $region18: #{patch_merging_forward.1} parent=0 // pred_check
    _
  $region19: #{patch_merging_forward.1} parent=0 // pred_check_branch
    %404 = sbr.rel (0) target = $region21
  $region20: #{patch_merging_forward.1} parent=0 // pred_region
    _
  $region21: #{patch_merging_forward.1} parent=0 // pred_fallthru
    _

</llo_original>
